<compile_context>
chip_gen: v7x
topology: tpu7x:2x2x1
jax: 0.10.0
libtpu: 0.0.40
codegen_flags: <defaults>
</compile_context>

<pallas_src>
import functools
from itertools import combinations

import jax
import jax.numpy as jnp
from jax.experimental import pallas as pl
from jax.experimental.pallas import tpu as pltpu


def _pair_mse_kernel(xr_ref, er_ref, xft_ref, eft_ref, sqx_ref, sqe_ref,
                     out_ref, *, tile_b, b_valid):
    """Per-row-tile partial sum of (K*est - real)^2 over strict-upper-tri pairs.

    xr_ref:  VMEM (tile_b, Dp)  row tile of x          (f32 or bf16)
    er_ref:  VMEM (tile_b, Ep)  row tile of K*E        (f32 or bf16)
    xft_ref: VMEM (Dp, Bc)      resident x^T           (f32 or bf16)
    eft_ref: VMEM (Ep, Bc)      resident (K*E)^T       (f32 or bf16)
    sqx_ref: VMEM (1, Bc)       resident ||x_j||^2     (f32)
    sqe_ref: VMEM (1, Bc)       resident ||K*e_j||^2   (f32)
    out_ref: SMEM (1, 1)        per-tile partial sum of squared errors
    """
    i = pl.program_id(0)

    xr = xr_ref[...]                                                   # (tile_b, Dp)
    er = er_ref[...]                                                   # (tile_b, Ep)

    # Lane-dense Gram matmuls against the pre-transposed resident full batch.
    gx = jnp.dot(xr, xft_ref[...], preferred_element_type=jnp.float32)  # (tile_b, Bc)
    ge = jnp.dot(er, eft_ref[...], preferred_element_type=jnp.float32)  # (tile_b, Bc)

    # Per-row squared norms of this tile (each row is visited exactly once
    # over the whole grid, so this is O(B*D) total VPU work).
    xr32 = xr.astype(jnp.float32)
    er32 = er.astype(jnp.float32)
    sq_xr = jnp.sum(xr32 * xr32, axis=1, keepdims=True)                # (tile_b, 1)
    sq_er = jnp.sum(er32 * er32, axis=1, keepdims=True)                # (tile_b, 1)

    # ||a - b||^2 = ||a||^2 + ||b||^2 - 2 a.b   (clamped at 0: cancellation guard)
    d2_real = jnp.maximum(sq_xr + sqx_ref[...] - 2.0 * gx, 0.0)        # (tile_b, Bc)
    d2_est = jnp.maximum(sq_er + sqe_ref[...] - 2.0 * ge, 0.0)         # (tile_b, Bc)
    # TODO(synk): guard sqrt(0) with an eps if a VJP is ever taken through this.
    real = jnp.sqrt(d2_real)
    est = jnp.sqrt(d2_est)          # K already folded into er / eft / sq_e

    # Strict-upper-triangle mask over GLOBAL indices.  Padded rows r >= b_valid
    # force cols > r >= b_valid, which violates cols < b_valid, so padding
    # rows and columns drop out automatically.
    rows = i * tile_b + jax.lax.broadcasted_iota(jnp.int32, gx.shape, 0)
    cols = jax.lax.broadcasted_iota(jnp.int32, gx.shape, 1)
    mask = (rows < cols) & (cols < b_valid)

    err = est - real
    out_ref[0, 0] = jnp.sum(jnp.where(mask, err * err, 0.0))


def isometric_embedding_loss(x, w, k, *, tile_b=None, use_bf16_matmul=False):
    """IsometricEmbedding pairwise-MSE loss for one batch.

    x: (B, D_in), w: (D_in, D_emb), k: (1,)  ->  scalar f32 loss
       mean over all unordered pairs (i<j) of (K*||x_i W - x_j W|| - ||x_i - x_j||)^2.
    """
    x = jnp.asarray(x, jnp.float32)
    w = jnp.asarray(w, jnp.float32)
    k = jnp.asarray(k, jnp.float32).reshape(())

    B, D_in = x.shape
    D_in_w, D_emb = w.shape
    assert D_in == D_in_w
    if B < 2:
        raise ValueError("IsometricEmbedding loss needs a batch of at least 2 rows.")

    SUB, LANE = 8, 128
    rup = lambda v, m: -(-v // m) * m

    Dp = rup(D_in, LANE)            # lane-dense contraction dims
    Ep = rup(D_emb, LANE)
    Bc = rup(B, LANE)               # column padding: 128 lanes only (decoupled)

    if tile_b is None:
        # Multiple of 8 sublanes; 512 feeds the 256-wide MXU M dim on v6e/v7x
        # (pass 256-384 explicitly for v5e's 128-wide MXU).
        tile_b = min(512, rup(B, SUB))
    tile_b = max(SUB, rup(tile_b, SUB))
    Br = rup(B, tile_b)             # row padding: grid tiles
    grid_b = Br // tile_b

    # ---- hoisted, loop-invariant precompute (runs ONCE, outside the grid) ----
    # Fold K into the embedding: K*||e_i - e_j|| == ||K*e_i - K*e_j||  (K >= 0;
    # the module initializes K = ones(1)).
    e = (x @ w) * k                                            # (B, D_emb)

    x_cols = jnp.pad(x, ((0, Bc - B), (0, Dp - D_in)))         # (Bc, Dp)
    e_cols = jnp.pad(e, ((0, Bc - B), (0, Ep - D_emb)))        # (Bc, Ep)
    sq_x = jnp.sum(x_cols * x_cols, axis=1)[None, :]           # (1, Bc) f32
    sq_e = jnp.sum(e_cols * e_cols, axis=1)[None, :]           # (1, Bc) f32
    x_ft = x_cols.T                                            # (Dp, Bc) one-time transpose
    e_ft = e_cols.T                                            # (Ep, Bc)

    x_rows = jnp.pad(x, ((0, Br - B), (0, Dp - D_in)))         # (Br, Dp) streamed tiles
    e_rows = jnp.pad(e, ((0, Br - B), (0, Ep - D_emb)))        # (Br, Ep)

    if use_bf16_matmul:
        # bf16 MXU operands, f32 accumulation (largest throughput lever on
        # v6e/v7x).  Loosen the self-test tolerance if enabled.
        x_rows, e_rows = x_rows.astype(jnp.bfloat16), e_rows.astype(jnp.bfloat16)
        x_ft, e_ft = x_ft.astype(jnp.bfloat16), e_ft.astype(jnp.bfloat16)

    n_pairs = B * (B - 1) // 2
    itemsize = 2 if use_bf16_matmul else 4

    # VMEM budget: double-buffered streamed row tiles + resident transposed
    # full-batch operands + (tile_b, Bc) f32 temporaries, clamped to ~75% of
    # this chip's physical VMEM (96 MiB on v5e/v6e, 48 MiB on v7x).
    working_set = (
        2 * tile_b * (Dp + Ep) * itemsize        # streamed row tiles (double-buffered)
        + 2 * (Dp + Ep) * Bc * itemsize          # resident x_ft / e_ft (default 2x buf)
        + 2 * 2 * Bc * 4                         # resident sq_x / sq_e
        + 8 * tile_b * Bc * 4                    # gx/ge/d2/dist/mask temporaries
    )
    try:
        vmem_cap = int(pltpu.get_tpu_info().vmem_capacity_bytes)
    except Exception:  # conservative fallback = v7x per-core capacity
        vmem_cap = 64 * 1024 * 1024
    vmem_limit = int(min(max(32 * 2**20, 2 * working_set), (3 * vmem_cap) // 4))

    kernel = functools.partial(_pair_mse_kernel, tile_b=tile_b, b_valid=B)

    partials = pl.pallas_call(
        kernel,
        out_shape=jax.ShapeDtypeStruct((grid_b, 1), jnp.float32),
        grid=(grid_b,),
        in_specs=[
            pl.BlockSpec((tile_b, Dp), lambda i: (i, 0)),   # streamed x row tile
            pl.BlockSpec((tile_b, Ep), lambda i: (i, 0)),   # streamed K*E row tile
            pl.BlockSpec((Dp, Bc), lambda i: (0, 0)),       # resident x^T
            pl.BlockSpec((Ep, Bc), lambda i: (0, 0)),       # resident (K*E)^T
            pl.BlockSpec((1, Bc), lambda i: (0, 0)),        # resident ||x_j||^2
            pl.BlockSpec((1, Bc), lambda i: (0, 0)),        # resident ||K*e_j||^2
        ],
        out_specs=pl.BlockSpec((1, 1), lambda i: (i, 0),
                               memory_space=pltpu.MemorySpace.SMEM),
        compiler_params=pltpu.CompilerParams(
            # Per-tile partial sums -> no cross-tile carry, so the row-tile
            # axis is "parallel" (shards across both v7x TensorCores).
            dimension_semantics=("parallel",),
            vmem_limit_bytes=vmem_limit,
        ),
    )(x_rows, e_rows, x_ft, e_ft, sq_x, sq_e)

    return jnp.sum(partials) / jnp.float32(n_pairs)


def _reference_loss(x, w, k):
    """Pure-JAX reference mirroring IsometricEmbedding._train_batch loss."""
    B = x.shape[0]
    pairs = list(combinations(range(B), 2))
    I = jnp.asarray([p[0] for p in pairs], dtype=jnp.int32)
    J = jnp.asarray([p[1] for p in pairs], dtype=jnp.int32)
    xi, xj = x[I], x[J]
    ei, ej = xi @ w, xj @ w
    est = jnp.sqrt(jnp.sum((ei - ej) ** 2, axis=-1))
    real = jnp.sqrt(jnp.sum((xi - xj) ** 2, axis=-1))
    return jnp.mean((k[0] * est - real) ** 2)


if __name__ == "__main__":
    key = jax.random.PRNGKey(0)
    k_x, k_w = jax.random.split(key)

    B, D_in, D_emb = 8, 32, 16
    x = jax.random.normal(k_x, (B, D_in), dtype=jnp.float32)

    # Deterministic synthetic parameters:
    #   K = Parameter(torch.ones(1))  -> ones(1)
    #   embedding weight W            -> deterministic normal init
    k_param = jnp.ones((1,), dtype=jnp.float32)
    w = jax.random.normal(k_w, (D_in, D_emb), dtype=jnp.float32) * (
        1.0 / jnp.sqrt(jnp.float32(D_in))
    )

    loss = isometric_embedding_loss(x, w, k_param)
    loss = jax.block_until_ready(loss)

    ref = _reference_loss(x, w, k_param)
    assert jnp.allclose(loss, ref, rtol=1e-4, atol=1e-4), (loss, ref)

    print("KERNEL_OK")
</pallas_src>

<mosaic_0001>
module attributes {stable_mosaic.version = 11 : i64} {
  func.func @_pair_mse_kernel(%arg0: i32, %arg1: memref<8x128xf32, #tpu.memory_space<vmem>>, %arg2: memref<8x128xf32, #tpu.memory_space<vmem>>, %arg3: memref<128x128xf32, #tpu.memory_space<vmem>>, %arg4: memref<128x128xf32, #tpu.memory_space<vmem>>, %arg5: memref<1x128xf32, #tpu.memory_space<vmem>>, %arg6: memref<1x128xf32, #tpu.memory_space<vmem>>, %arg7: memref<1x1xf32, #tpu.memory_space<smem>>) attributes {dimension_semantics = [#tpu.dimension_semantics<parallel>], iteration_bounds = array<i64: 1>, scalar_prefetch = 0 : i64, scratch_operands = 0 : i64, tpu.core_type = #tpu.core_type<tc>, window_params = [{transform_indices = @transform_0, window_bounds = array<i64: 8, 128>}, {transform_indices = @transform_1, window_bounds = array<i64: 8, 128>}, {pipeline_mode = #tpu.pipeline_mode<synchronous>, transform_indices = @transform_2, window_bounds = array<i64: 128, 128>}, {pipeline_mode = #tpu.pipeline_mode<synchronous>, transform_indices = @transform_3, window_bounds = array<i64: 128, 128>}, {pipeline_mode = #tpu.pipeline_mode<synchronous>, transform_indices = @transform_4, window_bounds = array<i64: 1, 128>}, {pipeline_mode = #tpu.pipeline_mode<synchronous>, transform_indices = @transform_5, window_bounds = array<i64: 1, 128>}, {transform_indices = @transform_6, window_bounds = array<i64: 1, 1>}]} {
    %c0 = arith.constant 0 : index
    %c0_0 = arith.constant 0 : index
    %0 = vector.load %arg1[%c0, %c0_0] : memref<8x128xf32, #tpu.memory_space<vmem>>, vector<8x128xf32>
    %c0_1 = arith.constant 0 : index
    %c0_2 = arith.constant 0 : index
    %1 = vector.load %arg2[%c0_1, %c0_2] : memref<8x128xf32, #tpu.memory_space<vmem>>, vector<8x128xf32>
    %c0_3 = arith.constant 0 : index
    %c0_4 = arith.constant 0 : index
    %2 = vector.load %arg3[%c0_3, %c0_4] : memref<128x128xf32, #tpu.memory_space<vmem>>, vector<128x128xf32>
    %cst = arith.constant dense<0.000000e+00> : vector<8x128xf32>
    %3 = tpu.matmul %0, %2, %cst {dimension_numbers = #tpu.dot_dimension_numbers<[1], [0], [0], [1], [0, 0, 1, 1], [], []>} : vector<8x128xf32>, vector<128x128xf32>, vector<8x128xf32> -> vector<8x128xf32>
    %c0_5 = arith.constant 0 : index
    %c0_6 = arith.constant 0 : index
    %4 = vector.load %arg4[%c0_5, %c0_6] : memref<128x128xf32, #tpu.memory_space<vmem>>, vector<128x128xf32>
    %cst_7 = arith.constant dense<0.000000e+00> : vector<8x128xf32>
    %5 = tpu.matmul %1, %4, %cst_7 {dimension_numbers = #tpu.dot_dimension_numbers<[1], [0], [0], [1], [0, 0, 1, 1], [], []>} : vector<8x128xf32>, vector<128x128xf32>, vector<8x128xf32> -> vector<8x128xf32>
    %6 = arith.mulf %0, %0 : vector<8x128xf32>
    %cst_8 = arith.constant dense<0.000000e+00> : vector<8xf32>
    %7 = vector.multi_reduction <add>, %6, %cst_8 [1] : vector<8x128xf32> to vector<8xf32>
    %8 = vector.shape_cast %7 : vector<8xf32> to vector<8x1xf32>
    %9 = arith.mulf %1, %1 : vector<8x128xf32>
    %cst_9 = arith.constant dense<0.000000e+00> : vector<8xf32>
    %10 = vector.multi_reduction <add>, %9, %cst_9 [1] : vector<8x128xf32> to vector<8xf32>
    %11 = vector.shape_cast %10 : vector<8xf32> to vector<8x1xf32>
    %c0_10 = arith.constant 0 : index
    %c0_11 = arith.constant 0 : index
    %12 = vector.load %arg5[%c0_10, %c0_11] : memref<1x128xf32, #tpu.memory_space<vmem>>, vector<1x128xf32>
    %13 = vector.broadcast %8 : vector<8x1xf32> to vector<8x128xf32>
    %14 = vector.broadcast %12 : vector<1x128xf32> to vector<8x128xf32>
    %15 = arith.addf %13, %14 : vector<8x128xf32>
    %cst_12 = arith.constant 2.000000e+00 : f32
    %16 = vector.broadcast %cst_12 : f32 to vector<8x128xf32>
    %17 = arith.mulf %16, %3 : vector<8x128xf32>
    %18 = arith.subf %15, %17 : vector<8x128xf32>
    %cst_13 = arith.constant 0.000000e+00 : f32
    %19 = vector.broadcast %cst_13 : f32 to vector<8x128xf32>
    %20 = arith.maximumf %18, %19 : vector<8x128xf32>
    %c0_14 = arith.constant 0 : index
    %c0_15 = arith.constant 0 : index
    %21 = vector.load %arg6[%c0_14, %c0_15] : memref<1x128xf32, #tpu.memory_space<vmem>>, vector<1x128xf32>
    %22 = vector.broadcast %11 : vector<8x1xf32> to vector<8x128xf32>
    %23 = vector.broadcast %21 : vector<1x128xf32> to vector<8x128xf32>
    %24 = arith.addf %22, %23 : vector<8x128xf32>
    %cst_16 = arith.constant 2.000000e+00 : f32
    %25 = vector.broadcast %cst_16 : f32 to vector<8x128xf32>
    %26 = arith.mulf %25, %5 : vector<8x128xf32>
    %27 = arith.subf %24, %26 : vector<8x128xf32>
    %cst_17 = arith.constant 0.000000e+00 : f32
    %28 = vector.broadcast %cst_17 : f32 to vector<8x128xf32>
    %29 = arith.maximumf %27, %28 : vector<8x128xf32>
    %30 = math.sqrt %20 : vector<8x128xf32>
    %31 = math.sqrt %29 : vector<8x128xf32>
    %c8_i32 = arith.constant 8 : i32
    %32 = arith.muli %arg0, %c8_i32 : i32
    %33 = tpu.iota {dimensions = array<i32: 0>} : vector<8x128xi32>
    %34 = vector.broadcast %32 : i32 to vector<8x128xi32>
    %35 = arith.addi %34, %33 : vector<8x128xi32>
    %36 = tpu.iota {dimensions = array<i32: 1>} : vector<8x128xi32>
    %37 = arith.cmpi slt, %35, %36 : vector<8x128xi32>
    %c8_i32_18 = arith.constant 8 : i32
    %38 = vector.broadcast %c8_i32_18 : i32 to vector<8x128xi32>
    %39 = arith.cmpi slt, %36, %38 : vector<8x128xi32>
    %40 = arith.andi %37, %39 : vector<8x128xi1>
    %41 = arith.subf %31, %30 : vector<8x128xf32>
    %42 = arith.mulf %41, %41 : vector<8x128xf32>
    %cst_19 = arith.constant 0.000000e+00 : f32
    %43 = vector.broadcast %cst_19 : f32 to vector<8x128xf32>
    %44 = arith.select %40, %42, %43 : vector<8x128xi1>, vector<8x128xf32>
    %45 = vector.shape_cast %44 : vector<8x128xf32> to vector<1x8x128xf32>
    %cst_20 = arith.constant dense<0.000000e+00> : vector<1xf32>
    %46 = vector.multi_reduction <add>, %45, %cst_20 [1, 2] : vector<1x8x128xf32> to vector<1xf32>
    %47 = vector.shape_cast %46 : vector<1xf32> to vector<1x1x1xf32>
    %48 = vector.extract %47[0, 0, 0] : f32 from vector<1x1x1xf32>
    %c0_21 = arith.constant 0 : index
    %c0_22 = arith.constant 0 : index
    %49 = memref.load %arg7[%c0_21, %c0_22] : memref<1x1xf32, #tpu.memory_space<smem>>
    memref.store %48, %arg7[%c0_21, %c0_22] : memref<1x1xf32, #tpu.memory_space<smem>>
    return
  }
  func.func @transform_0(%arg0: i32) -> (i32, i32) {
    %c0_i32 = arith.constant 0 : i32
    %c0_i32_0 = arith.constant 0 : i32
    return %arg0, %c0_i32 : i32, i32
  }
  func.func @transform_1(%arg0: i32) -> (i32, i32) {
    %c0_i32 = arith.constant 0 : i32
    %c0_i32_0 = arith.constant 0 : i32
    return %arg0, %c0_i32 : i32, i32
  }
  func.func @transform_2(%arg0: i32) -> (i32, i32) {
    %c0_i32 = arith.constant 0 : i32
    %c0_i32_0 = arith.constant 0 : i32
    %c0_i32_1 = arith.constant 0 : i32
    return %c0_i32, %c0_i32_0 : i32, i32
  }
  func.func @transform_3(%arg0: i32) -> (i32, i32) {
    %c0_i32 = arith.constant 0 : i32
    %c0_i32_0 = arith.constant 0 : i32
    %c0_i32_1 = arith.constant 0 : i32
    return %c0_i32, %c0_i32_0 : i32, i32
  }
  func.func @transform_4(%arg0: i32) -> (i32, i32) {
    %c0_i32 = arith.constant 0 : i32
    %c0_i32_0 = arith.constant 0 : i32
    %c0_i32_1 = arith.constant 0 : i32
    return %c0_i32, %c0_i32_0 : i32, i32
  }
  func.func @transform_5(%arg0: i32) -> (i32, i32) {
    %c0_i32 = arith.constant 0 : i32
    %c0_i32_0 = arith.constant 0 : i32
    %c0_i32_1 = arith.constant 0 : i32
    return %c0_i32, %c0_i32_0 : i32, i32
  }
  func.func @transform_6(%arg0: i32) -> (i32, i32) {
    %c0_i32 = arith.constant 0 : i32
    %c0_i32_0 = arith.constant 0 : i32
    return %arg0, %c0_i32 : i32, i32
  }
}

</mosaic_0001>

<llo_original>
// kernel: tpu_custom_call.1
$region0: #{tpu_custom_call.1}
  #allocation0 [shape = 'u32[]', space=smem, size = 0x4, offset = 0x4, fixed_abs, tag = 'smem constant byte address 0x4 - core index']
  #allocation1 [shape = 'u32[144,128]{1,0:T(1,128)}', space=vmem, size = 0x12000, scoped, tag = 'internal scratch']
  %s0 = inlined_call_operand.hbm [shape: f32[8,128], index: 0, kind: input, shape index: {}]
  %s1 = inlined_call_operand.hbm [shape: f32[8,128], index: 1, kind: input, shape index: {}]
  %s2 = inlined_call_operand.hbm [shape: f32[128,128], index: 2, kind: input, shape index: {}]
  %s3 = inlined_call_operand.hbm [shape: f32[128,128], index: 3, kind: input, shape index: {}]
  %s4 = inlined_call_operand.vmem [shape: f32[1,128], index: 4, kind: input, shape index: {}]
  %s5 = inlined_call_operand.vmem [shape: f32[1,128], index: 5, kind: input, shape index: {}]
  %s6 = inlined_call_operand.hbm [shape: f32[1,1], index: 6, kind: output, shape index: {}]
  %s7 = sld [smem:[#allocation0]]
  $region50: #{tpu_custom_call.1} parent=0
    _
  %s9 = ssub.s32 1, %s7
  %s10 = scalar_select 0, %s9, %s7
  $region1: #{tpu_custom_call.1} parent=0
    #allocation2 [shape = 'u8[4096]{0}', space=vmem, size = 0x1000, scoped, tag = 'input window, operand 0, single buffered']
    #allocation3 [shape = 's32[1]{0}', space=sflag, size = 0x4, scoped, tag = 'scoped memory for tpu_custom_call.1']
    #allocation4 [shape = 's32[1]{0}', space=sflag, size = 0x4, scoped, tag = 'scoped memory for tpu_custom_call.1']
    #allocation5 [shape = 'u8[4096]{0}', space=vmem, size = 0x1000, scoped, tag = 'input window, operand 1, single buffered']
    #allocation6 [shape = 's32[1]{0}', space=sflag, size = 0x4, scoped, tag = 'scoped memory for tpu_custom_call.1']
    #allocation7 [shape = 'u8[65536]{0}', space=vmem, size = 0x10000, scoped, tag = 'input window, operand 2, single buffered']
    #allocation8 [shape = 'u8[65536]{0}', space=vmem, size = 0x10000, scoped, tag = 'input window, operand 3, single buffered']
    #allocation9 [shape = 's32[1]{0}', space=sflag, size = 0x4, scoped, tag = 'scoped memory for tpu_custom_call.1']
    #allocation10 [shape = 'u8[512]{0}', space=smem, size = 0x200, scoped, tag = 'output window, operand 0, single buffered']
    %11 = vsyncpa [#allocation3], 0
    %12 = vsyncpa [#allocation6], 0
    %13 = vsyncpa [#allocation9], 0
    %14 = vsyncpa [#allocation4], 0
    // Predicated region
    $region2: #{tpu_custom_call.1} parent=1 // pred_check
      _
    $region3: #{tpu_custom_call.1} parent=1 // pred_check_branch
      %16 = sbr.rel (0) target = $region5
    $region4: #{tpu_custom_call.1} parent=1 // pred_region
      %s18 = ssub.s32 128, 128
      %19 = vsyncadd [#allocation3], %s18
      %s21 = sshll.u32 [#allocation2], 4
      %s22 = int_to_ptr.vmem [resolvable:$true] %s21
      %24 = dma.hbm_to_vmem [thread:$0]  %s0, 128, %s22, [#allocation3]
    $region5: #{tpu_custom_call.1} parent=1 // pred_fallthru
      _
    // Predicated region
    $region6: #{tpu_custom_call.1} parent=1 // pred_check
      _
    $region7: #{tpu_custom_call.1} parent=1 // pred_check_branch
      %26 = sbr.rel (0) target = $region9
    $region8: #{tpu_custom_call.1} parent=1 // pred_region
      %s28 = ssub.s32 128, 128
      %29 = vsyncadd [#allocation6], %s28
      %s31 = sshll.u32 [#allocation5], 4
      %s32 = int_to_ptr.vmem [resolvable:$true] %s31
      %34 = dma.hbm_to_vmem [thread:$0]  %s1, 128, %s32, [#allocation6]
    $region9: #{tpu_custom_call.1} parent=1 // pred_fallthru
      _
    // Predicated region
    $region10: #{tpu_custom_call.1} parent=1 // pred_check
      _
    $region11: #{tpu_custom_call.1} parent=1 // pred_check_branch
      %36 = sbr.rel (0) target = $region13
    $region12: #{tpu_custom_call.1} parent=1 // pred_region
      %s38 = ssub.s32 2048, 2048
      %39 = vsyncadd [#allocation6], %s38
      %s40 = sshll.u32 [#allocation7], 4
      %s41 = int_to_ptr.vmem [resolvable:$true] %s40
      %46 = dma.hbm_to_vmem [thread:$0]  %s2, 2048, %s41, [#allocation6], 128, 128, 8
    $region13: #{tpu_custom_call.1} parent=1 // pred_fallthru
      _
    // Predicated region
    $region14: #{tpu_custom_call.1} parent=1 // pred_check
      _
    $region15: #{tpu_custom_call.1} parent=1 // pred_check_branch
      %48 = sbr.rel (0) target = $region17
    $region16: #{tpu_custom_call.1} parent=1 // pred_region
      %s50 = ssub.s32 2048, 2048
      %51 = vsyncadd [#allocation9], %s50
      %s52 = sshll.u32 [#allocation8], 4
      %s53 = int_to_ptr.vmem [resolvable:$true] %s52
      %58 = dma.hbm_to_vmem [thread:$0]  %s3, 2048, %s53, [#allocation9], 128, 128, 8
    $region17: #{tpu_custom_call.1} parent=1 // pred_fallthru
      _
    // Predicated region
    $region18: #{tpu_custom_call.1} parent=1 // pred_check
      _
    $region19: #{tpu_custom_call.1} parent=1 // pred_check_branch
      %60 = sbr.rel (0) target = $region21
    $region20: #{tpu_custom_call.1} parent=1 // pred_region
      _
    $region21: #{tpu_custom_call.1} parent=1 // pred_fallthru
      _
    // Predicated region
    $region22: #{tpu_custom_call.1} parent=1 // pred_check
      _
    $region23: #{tpu_custom_call.1} parent=1 // pred_check_branch
      %62 = sbr.rel (0) target = $region25
    $region24: #{tpu_custom_call.1} parent=1 // pred_region
      _
    $region25: #{tpu_custom_call.1} parent=1 // pred_fallthru
      _
    // Predicated region
    $region26: #{tpu_custom_call.1} parent=1 // pred_check
      _
    $region27: #{tpu_custom_call.1} parent=1 // pred_check_branch
      %64 = sbr.rel (0) target = $region29
    $region28: #{tpu_custom_call.1} parent=1 // pred_region
      %65 = dma.done [#allocation3], 128
    $region29: #{tpu_custom_call.1} parent=1 // pred_fallthru
      _
    // Predicated region
    $region30: #{tpu_custom_call.1} parent=1 // pred_check
      _
    $region31: #{tpu_custom_call.1} parent=1 // pred_check_branch
      %67 = sbr.rel (0) target = $region33
    $region32: #{tpu_custom_call.1} parent=1 // pred_region
      %68 = dma.done [#allocation6], 128
    $region33: #{tpu_custom_call.1} parent=1 // pred_fallthru
      _
    // Predicated region
    $region34: #{tpu_custom_call.1} parent=1 // pred_check
      _
    $region35: #{tpu_custom_call.1} parent=1 // pred_check_branch
      %70 = sbr.rel (0) target = $region37
    $region36: #{tpu_custom_call.1} parent=1 // pred_region
      %71 = dma.done [#allocation6], 2048
    $region37: #{tpu_custom_call.1} parent=1 // pred_fallthru
      _
    // Predicated region
    $region38: #{tpu_custom_call.1} parent=1 // pred_check
      _
    $region39: #{tpu_custom_call.1} parent=1 // pred_check_branch
      %73 = sbr.rel (0) target = $region41
    $region40: #{tpu_custom_call.1} parent=1 // pred_region
      %74 = dma.done [#allocation9], 2048
    $region41: #{tpu_custom_call.1} parent=1 // pred_fallthru
      _
    %v75 = vld [vmem:[#allocation2] sm:$0xff]
    %v76 = vld [vmem:[#allocation5] sm:$0xff]
    %v77 = vld [vmem:[#allocation7] sm:$0xff]
    %v78 = vld [vmem:[#allocation7 + $0x8] sm:$0xff]
    %v79 = vld [vmem:[#allocation7 + $0x10] sm:$0xff]
    %v80 = vld [vmem:[#allocation7 + $0x18] sm:$0xff]
    %v81 = vld [vmem:[#allocation7 + $0x20] sm:$0xff]
    %v82 = vld [vmem:[#allocation7 + $0x28] sm:$0xff]
    %v83 = vld [vmem:[#allocation7 + $0x30] sm:$0xff]
    %v84 = vld [vmem:[#allocation7 + $0x38] sm:$0xff]
    %v85 = vld [vmem:[#allocation7 + $0x40] sm:$0xff]
    %v86 = vld [vmem:[#allocation7 + $0x48] sm:$0xff]
    %v87 = vld [vmem:[#allocation7 + $0x50] sm:$0xff]
    %v88 = vld [vmem:[#allocation7 + $0x58] sm:$0xff]
    %v89 = vld [vmem:[#allocation7 + $0x60] sm:$0xff]
    %v90 = vld [vmem:[#allocation7 + $0x68] sm:$0xff]
    %v91 = vld [vmem:[#allocation7 + $0x70] sm:$0xff]
    %v92 = vld [vmem:[#allocation7 + $0x78] sm:$0xff]
    %93 = vmatprep.subr.mxu0 0.0
    %94 = vmatpush1.msra.mxu0 %v77
    %95 = vmatprep.subr.mxu0 0.0
    %96 = vmatpush1.msra.mxu0 %v78
    %97 = vmatprep.subr.mxu0 0.0
    %98 = vmatpush1.msra.mxu0 %v79
    %99 = vmatprep.subr.mxu0 0.0
    %100 = vmatpush1.msra.mxu0 %v80
    %101 = vmatprep.subr.mxu0 0.0
    %102 = vmatpush1.msra.mxu0 %v81
    %103 = vmatprep.subr.mxu0 0.0
    %104 = vmatpush1.msra.mxu0 %v82
    %105 = vmatprep.subr.mxu0 0.0
    %106 = vmatpush1.msra.mxu0 %v83
    %107 = vmatprep.subr.mxu0 0.0
    %108 = vmatpush1.msra.mxu0 %v84
    %109 = vmatprep.subr.mxu0 0.0
    %110 = vmatpush1.msra.mxu0 %v85
    %111 = vmatprep.subr.mxu0 0.0
    %112 = vmatpush1.msra.mxu0 %v86
    %113 = vmatprep.subr.mxu0 0.0
    %114 = vmatpush1.msra.mxu0 %v87
    %115 = vmatprep.subr.mxu0 0.0
    %116 = vmatpush1.msra.mxu0 %v88
    %117 = vmatprep.subr.mxu0 0.0
    %118 = vmatpush1.msra.mxu0 %v89
    %119 = vmatprep.subr.mxu0 0.0
    %120 = vmatpush1.msra.mxu0 %v90
    %121 = vmatprep.subr.mxu0 0.0
    %122 = vmatpush1.msra.mxu0 %v91
    %123 = vmatprep.subr.mxu0 0.0
    %124 = vmatpush1.msra.mxu0 %v92
    %125 = vmatprep.subr.mxu0 0.0
    %126 = vmatpush1.msra.mxu0 0.0
    %127 = vmatprep.subr.mxu0 0.0
    %128 = vmatpush1.msra.mxu0 0.0
    %129 = vmatprep.subr.mxu0 0.0
    %130 = vmatpush1.msra.mxu0 0.0
    %131 = vmatprep.subr.mxu0 0.0
    %132 = vmatpush1.msra.mxu0 0.0
    %133 = vmatprep.subr.mxu0 0.0
    %134 = vmatpush1.msra.mxu0 0.0
    %135 = vmatprep.subr.mxu0 0.0
    %136 = vmatpush1.msra.mxu0 0.0
    %137 = vmatprep.subr.mxu0 0.0
    %138 = vmatpush1.msra.mxu0 0.0
    %139 = vmatprep.subr.mxu0 0.0
    %140 = vmatpush1.msra.mxu0 0.0
    %141 = vmatprep.subr.mxu0 0.0
    %142 = vmatpush1.msra.mxu0 0.0
    %143 = vmatprep.subr.mxu0 0.0
    %144 = vmatpush1.msra.mxu0 0.0
    %145 = vmatprep.subr.mxu0 0.0
    %146 = vmatpush1.msra.mxu0 0.0
    %147 = vmatprep.subr.mxu0 0.0
    %148 = vmatpush1.msra.mxu0 0.0
    %149 = vmatprep.subr.mxu0 0.0
    %150 = vmatpush1.msra.mxu0 0.0
    %151 = vmatprep.subr.mxu0 0.0
    %152 = vmatpush1.msra.mxu0 0.0
    %153 = vmatprep.subr.mxu0 0.0
    %154 = vmatpush1.msra.mxu0 0.0
    %155 = vmatprep.subr.mxu0 0.0
    %156 = vmatpush1.msra.mxu0 0.0
    %157 = vmatprep.mubr.f32.mxu0 0.0
    %158 = vmatmul.mubr.f32.gmra.mrb[0].mxu0 %v75
    %v159 = vpop.f32.mrb[0].mxu0
    %v160 = vadd.f32 0.0, %v159
    %v161 = vpop.f32.mrb[0].mxu0
    %162 = vdwg.mxu0
    %v163 = vld [vmem:[#allocation8] sm:$0xff]
    %v164 = vld [vmem:[#allocation8 + $0x8] sm:$0xff]
    %v165 = vld [vmem:[#allocation8 + $0x10] sm:$0xff]
    %v166 = vld [vmem:[#allocation8 + $0x18] sm:$0xff]
    %v167 = vld [vmem:[#allocation8 + $0x20] sm:$0xff]
    %v168 = vld [vmem:[#allocation8 + $0x28] sm:$0xff]
    %v169 = vld [vmem:[#allocation8 + $0x30] sm:$0xff]
    %v170 = vld [vmem:[#allocation8 + $0x38] sm:$0xff]
    %v171 = vld [vmem:[#allocation8 + $0x40] sm:$0xff]
    %v172 = vld [vmem:[#allocation8 + $0x48] sm:$0xff]
    %v173 = vld [vmem:[#allocation8 + $0x50] sm:$0xff]
    %v174 = vld [vmem:[#allocation8 + $0x58] sm:$0xff]
    %v175 = vld [vmem:[#allocation8 + $0x60] sm:$0xff]
    %v176 = vld [vmem:[#allocation8 + $0x68] sm:$0xff]
    %v177 = vld [vmem:[#allocation8 + $0x70] sm:$0xff]
    %v178 = vld [vmem:[#allocation8 + $0x78] sm:$0xff]
    %179 = vmatprep.subr.mxu0 0.0
    %180 = vmatpush1.msra.mxu0 %v163
    %181 = vmatprep.subr.mxu0 0.0
    %182 = vmatpush1.msra.mxu0 %v164
    %183 = vmatprep.subr.mxu0 0.0
    %184 = vmatpush1.msra.mxu0 %v165
    %185 = vmatprep.subr.mxu0 0.0
    %186 = vmatpush1.msra.mxu0 %v166
    %187 = vmatprep.subr.mxu0 0.0
    %188 = vmatpush1.msra.mxu0 %v167
    %189 = vmatprep.subr.mxu0 0.0
    %190 = vmatpush1.msra.mxu0 %v168
    %191 = vmatprep.subr.mxu0 0.0
    %192 = vmatpush1.msra.mxu0 %v169
    %193 = vmatprep.subr.mxu0 0.0
    %194 = vmatpush1.msra.mxu0 %v170
    %195 = vmatprep.subr.mxu0 0.0
    %196 = vmatpush1.msra.mxu0 %v171
    %197 = vmatprep.subr.mxu0 0.0
    %198 = vmatpush1.msra.mxu0 %v172
    %199 = vmatprep.subr.mxu0 0.0
    %200 = vmatpush1.msra.mxu0 %v173
    %201 = vmatprep.subr.mxu0 0.0
    %202 = vmatpush1.msra.mxu0 %v174
    %203 = vmatprep.subr.mxu0 0.0
    %204 = vmatpush1.msra.mxu0 %v175
    %205 = vmatprep.subr.mxu0 0.0
    %206 = vmatpush1.msra.mxu0 %v176
    %207 = vmatprep.subr.mxu0 0.0
    %208 = vmatpush1.msra.mxu0 %v177
    %209 = vmatprep.subr.mxu0 0.0
    %210 = vmatpush1.msra.mxu0 %v178
    %211 = vmatprep.subr.mxu0 0.0
    %212 = vmatpush1.msra.mxu0 0.0
    %213 = vmatprep.subr.mxu0 0.0
    %214 = vmatpush1.msra.mxu0 0.0
    %215 = vmatprep.subr.mxu0 0.0
    %216 = vmatpush1.msra.mxu0 0.0
    %217 = vmatprep.subr.mxu0 0.0
    %218 = vmatpush1.msra.mxu0 0.0
    %219 = vmatprep.subr.mxu0 0.0
    %220 = vmatpush1.msra.mxu0 0.0
    %221 = vmatprep.subr.mxu0 0.0
    %222 = vmatpush1.msra.mxu0 0.0
    %223 = vmatprep.subr.mxu0 0.0
    %224 = vmatpush1.msra.mxu0 0.0
    %225 = vmatprep.subr.mxu0 0.0
    %226 = vmatpush1.msra.mxu0 0.0
    %227 = vmatprep.subr.mxu0 0.0
    %228 = vmatpush1.msra.mxu0 0.0
    %229 = vmatprep.subr.mxu0 0.0
    %230 = vmatpush1.msra.mxu0 0.0
    %231 = vmatprep.subr.mxu0 0.0
    %232 = vmatpush1.msra.mxu0 0.0
    %233 = vmatprep.subr.mxu0 0.0
    %234 = vmatpush1.msra.mxu0 0.0
    %235 = vmatprep.subr.mxu0 0.0
    %236 = vmatpush1.msra.mxu0 0.0
    %237 = vmatprep.subr.mxu0 0.0
    %238 = vmatpush1.msra.mxu0 0.0
    %239 = vmatprep.subr.mxu0 0.0
    %240 = vmatpush1.msra.mxu0 0.0
    %241 = vmatprep.subr.mxu0 0.0
    %242 = vmatpush1.msra.mxu0 0.0
    %243 = vmatprep.mubr.f32.mxu0 0.0
    %244 = vmatmul.mubr.f32.gmra.mrb[0].mxu0 %v76
    %v245 = vpop.f32.mrb[0].mxu0
    %v246 = vadd.f32 0.0, %v245
    %v247 = vpop.f32.mrb[0].mxu0
    %248 = vdwg.mxu0
    %v249 = vmul.f32 %v75, %v75
    %250 = vadd.xlane.f32.xlu0 %v249
    %v251 = vpop.xlane.xlu0 %250
    %v252 = vmul.f32 %v76, %v76
    %253 = vadd.xlane.f32.xlu0 %v252
    %v254 = vpop.xlane.xlu0 %253
    %v255 = vld [vmem:[%s4] sm:$0x1]
    %v257 = vlaneseq
    %v258 = vshrl.u32 %v257, 7
    %v259 = vsub.s32 0, %v258
    %v260 = vrot.slane %v255, %v259
    %v262 = vadd.f32 %v251, %v260
    %v263 = vmul.f32 %v160, 2.0
    %v264 = vsub.f32 %v262, %v263
    %v265 = vmax.f32 %v264, 0.0
    %v266 = vld [vmem:[%s5] sm:$0x1]
    %v268 = vlaneseq
    %v269 = vshrl.u32 %v268, 7
    %v270 = vsub.s32 0, %v269
    %v271 = vrot.slane %v266, %v270
    %v273 = vadd.f32 %v254, %v271
    %v274 = vmul.f32 %v246, 2.0
    %v275 = vsub.f32 %v273, %v274
    %v276 = vmax.f32 %v275, 0.0
    %v277 = vrsqrt.pop %v265
    %v278 = vmul.f32 %v265, %v277
    %vm279 = vcmp.eq.f32.partialorder %v265, inf
    %v280 = vsel %vm279, %v265, %v278
    %vm281 = vcmp.eq.f32.partialorder %v265, 0.0
    %v282 = vand.u32 %v265, 2147483648
    %v283 = vsel %vm281, %v282, %v280
    %v284 = vrsqrt.pop %v276
    %v285 = vmul.f32 %v276, %v284
    %vm286 = vcmp.eq.f32.partialorder %v276, inf
    %v287 = vsel %vm286, %v276, %v285
    %vm288 = vcmp.eq.f32.partialorder %v276, 0.0
    %v289 = vand.u32 %v276, 2147483648
    %v290 = vsel %vm288, %v289, %v287
    %s291 = smul.u32 0, 8
    %v292 = vlaneseq
    %v293 = vshrl.u32 %v292, 7
    %v294 = vstv %s291
    %v295 = vadd.s32 %v294, %v293
    %v296 = vlaneseq
    %v297 = vand.u32 %v296, 127
    %vm298 = vcmp.lt.s32.totalorder %v295, %v297
    %vm299 = vcmp.lt.s32.totalorder %v297, 8
    %vm300 = vmand %vm298, %vm299
    %v301 = vsub.f32 %v290, %v283
    %v302 = vmul.f32 %v301, %v301
    %v303 = vsel %vm300, %v302, 0.0
    %304 = vadd.xlane.f32.xlu0 %v303
    %v305 = vpop.xlane.xlu0 %304
    %v306 = vrot.slane %v305, 4
    %v307 = vadd.f32 %v305, %v306
    %v308 = vrot.slane %v307, 2
    %v309 = vadd.f32 %v307, %v308
    %v310 = vrot.slane %v309, 1
    %v311 = vadd.f32 %v309, %v310
    %s312 = vtos %v311
    %s313 = scalar_lea.smem [#allocation10], 0
    %314 = sst [smem:[%s313]] %s312
    // Predicated region
    $region42: #{tpu_custom_call.1} parent=1 // pred_check
      _
    $region43: #{tpu_custom_call.1} parent=1 // pred_check_branch
      %316 = sbr.rel (0) target = $region45
    $region44: #{tpu_custom_call.1} parent=1 // pred_region
      %s318 = ssub.s32 16, 16
      %319 = vsyncadd [#allocation4], %s318
      %322 = dma.smem_to_hbm [#allocation10], 16, %s6, [#allocation4]
    $region45: #{tpu_custom_call.1} parent=1 // pred_fallthru
      _
    // Predicated region
    $region46: #{tpu_custom_call.1} parent=1 // pred_check
      _
    $region47: #{tpu_custom_call.1} parent=1 // pred_check_branch
      %324 = sbr.rel (0) target = $region49
    $region48: #{tpu_custom_call.1} parent=1 // pred_region
      %325 = dma.done [#allocation4], 16
    $region49: #{tpu_custom_call.1} parent=1 // pred_fallthru
      _
    %326 = sfence
    %327 = vsyncpa [#allocation3], 1
    %328 = vsyncpa [#allocation6], 1
    %329 = vsyncpa [#allocation9], 1
    %330 = vsyncpa [#allocation4], 1

</llo_original>
